<compile_context>
chip_gen: v5e
topology: v5e:2x2
jax: 0.10.0
libtpu: 0.0.40
codegen_flags: <defaults>
</compile_context>

<pallas_src>
import functools

import jax
import jax.numpy as jnp
from jax.experimental import pallas as pl
from jax.experimental.pallas import tpu as pltpu

LANE = 128                      # pad every output / head-K width to this
_BM_MAX = 512                   # max batch-tile rows per grid step
_TILE_VMEM_BUDGET = 24 << 20    # per-tile working-set target (v7x-safe)


def _round_up(x, m):
    return ((x + m - 1) // m) * m


# ---------------------------------------------------------------------------
# Kernel bodies (bf16 MXU operands, f32 accumulation, bf16 stores)
# ---------------------------------------------------------------------------

def _fm_body(x_ref, w1, b1, w2, b2, w3, b3):
    # Linear(D,64) -> ReLU -> Linear(64,64) -> ReLU -> Linear(64,D), outputs
    # padded to 128-lane multiples; x is cast to bf16 in-kernel (no HBM copy).
    x = x_ref[...].astype(jnp.bfloat16)
    h1 = jnp.dot(x, w1[...], preferred_element_type=jnp.float32)
    h1 = jnp.maximum(h1 + b1[...], 0.0).astype(jnp.bfloat16)
    h2 = jnp.dot(h1, w2[...], preferred_element_type=jnp.float32)
    h2 = jnp.maximum(h2 + b2[...], 0.0).astype(jnp.bfloat16)
    return jnp.dot(h2, w3[...], preferred_element_type=jnp.float32) + b3[...]


def _feature_kernel(x_ref, w1, b1, w2, b2, w3, b3, o_ref):
    o_ref[...] = _fm_body(x_ref, w1, b1, w2, b2, w3, b3).astype(o_ref.dtype)


def _sbj_kernel(x_ref, w1, b1, w2, b2, w3, b3, sw, sb, o_ref):
    f = _fm_body(x_ref, w1, b1, w2, b2, w3, b3)
    s = jnp.dot(f.astype(jnp.bfloat16), sw[...],
                preferred_element_type=jnp.float32) + sb[...]
    o_ref[...] = s.astype(o_ref.dtype)


def _feature_sbj_kernel(x_ref, w1, b1, w2, b2, w3, b3, sw, sb, f_ref, s_ref):
    f = _fm_body(x_ref, w1, b1, w2, b2, w3, b3)
    f_ref[...] = f.astype(f_ref.dtype)
    s = jnp.dot(f.astype(jnp.bfloat16), sw[...],
                preferred_element_type=jnp.float32) + sb[...]
    s_ref[...] = s.astype(s_ref.dtype)


def _task_mlp_kernel(x_ref, w1, b1, w2, b2, w3, b3, tw1, tb1, tw2, tb2, o_ref):
    f = _fm_body(x_ref, w1, b1, w2, b2, w3, b3)
    h = jnp.dot(f.astype(jnp.bfloat16), tw1[...],
                preferred_element_type=jnp.float32)
    h = jnp.maximum(h + tb1[...], 0.0).astype(jnp.bfloat16)
    o = jnp.dot(h, tw2[...], preferred_element_type=jnp.float32) + tb2[...]
    o_ref[...] = o.astype(o_ref.dtype)


def _task_lr_kernel(x_ref, w1, b1, w2, b2, w3, b3, tw1, tb1, o_ref):
    f = _fm_body(x_ref, w1, b1, w2, b2, w3, b3)
    o = jnp.dot(f.astype(jnp.bfloat16), tw1[...],
                preferred_element_type=jnp.float32) + tb1[...]
    o_ref[...] = o.astype(o_ref.dtype)


# ---------------------------------------------------------------------------
# Batch-tile planner + fused pallas_call wrapper
# ---------------------------------------------------------------------------

def _plan_batch_tile(B, D, weights, out_widths):
    """Pick (bm, Bp, vmem_limit): bm multiple of 16, >=2 grid steps when the
    batch is big enough (v7x megacore), clamped against a VMEM budget."""
    # Resident weights are double-buffered by the BlockSpec pipeline.
    w_bytes = 2 * sum(int(w.size) * w.dtype.itemsize for w in weights)

    def tile_bytes(bm):
        x_b = 2 * bm * D * 4                                # f32 input, 2 bufs
        o_b = 2 * sum(bm * n * 2 for n in out_widths)       # bf16 outputs, 2 bufs
        inter = bm * (2 * LANE + sum(out_widths)) * 4       # f32 h1/h2/f live vals
        return x_b + o_b + inter

    if B <= 32:
        bm = _round_up(B, 16)
    else:
        bm = min(_BM_MAX, _round_up(-(-B // 2), 16))        # >=2 tiles, <=512 rows
    while bm > 16 and w_bytes + tile_bytes(bm) > _TILE_VMEM_BUDGET:
        bm = _round_up(bm // 2, 16)
    Bp = _round_up(B, bm)
    vmem_limit = int(min(64 << 20, max(32 << 20, 2 * (w_bytes + tile_bytes(bm)))))
    return bm, Bp, vmem_limit


@functools.partial(jax.jit, static_argnums=(0, 2, 3))
def _run(kernel, x, out_widths, valid_widths, *weights):
    """One fused pallas_call over a batch grid; weights stay whole-array
    resident in VMEM.  Returns f32 outputs sliced to their valid widths."""
    B, D = x.shape
    bm, Bp, vmem_limit = _plan_batch_tile(B, D, weights, out_widths)
    x_p = x if Bp == B else jnp.pad(x, ((0, Bp - B), (0, 0)))
    grid = Bp // bm

    in_specs = [pl.BlockSpec((bm, D), lambda i: (i, 0))]
    in_specs += [pl.BlockSpec(w.shape, lambda i: (0, 0)) for w in weights]

    out_shape = tuple(jax.ShapeDtypeStruct((Bp, n), jnp.bfloat16)
                      for n in out_widths)
    out_specs = tuple(pl.BlockSpec((bm, n), lambda i: (i, 0))
                      for n in out_widths)

    single = len(out_widths) == 1
    res = pl.pallas_call(
        kernel,
        out_shape=out_shape[0] if single else out_shape,
        grid=(grid,),
        in_specs=in_specs,
        out_specs=out_specs[0] if single else out_specs,
        compiler_params=pltpu.CompilerParams(
            dimension_semantics=("parallel",),
            vmem_limit_bytes=vmem_limit),
    )(x_p, *weights)
    outs = (res,) if single else res
    # Slice + f32 cast fuse with the pad inside this jit (single XLA program).
    return tuple(o[:B, :w].astype(jnp.float32)
                 for o, w in zip(outs, valid_widths))


# ---------------------------------------------------------------------------
# Parameter init (matches torch.nn.Linear default: U(-1/sqrt(fan_in), +))
# ---------------------------------------------------------------------------

def _init_linear(key, fan_in, fan_out):
    kw, kb = jax.random.split(key)
    bound = 1.0 / jnp.sqrt(float(fan_in))
    w = jax.random.uniform(kw, (fan_in, fan_out), jnp.float32, -bound, bound)
    b = jax.random.uniform(kb, (1, fan_out), jnp.float32, -bound, bound)
    return w, b


def _pad_w(w, rows, cols):
    w = jnp.pad(w, ((0, rows - w.shape[0]), (0, cols - w.shape[1])))
    return w.astype(jnp.bfloat16)


def _pad_b(b, cols):
    return jnp.pad(b, ((0, 0), (0, cols - b.shape[1]))).astype(jnp.float32)


class MLPWhitingPallas:
    feature_idx = None

    def __init__(self, input_dim, sbj_dim, task_in_dim, task_out_dim,
                 classifier='MLP', *, key):
        self.classifier = classifier
        self.input_dim = input_dim
        self.sbj_dim = sbj_dim
        self.task_in_dim = task_in_dim
        self.task_out_dim = task_out_dim

        self.Dp = _round_up(input_dim, LANE)   # feature store width / head K-dim
        Hp = _round_up(64, LANE)
        self.Sp = _round_up(sbj_dim, LANE)
        self.T32p = _round_up(32, LANE)
        self.Top = _round_up(task_out_dim, LANE)

        keys = jax.random.split(key, 6)
        # Unpadded f32 parameters (reference / state).
        self.fm_w1, self.fm_b1 = _init_linear(keys[0], input_dim, 64)
        self.fm_w2, self.fm_b2 = _init_linear(keys[1], 64, 64)
        self.fm_w3, self.fm_b3 = _init_linear(keys[2], 64, input_dim)
        self.sbj_w, self.sbj_b = _init_linear(keys[3], input_dim, sbj_dim)
        if classifier == 'LR':
            self.task_w1, self.task_b1 = _init_linear(keys[4], task_in_dim,
                                                      task_out_dim)
            self.task_w2 = self.task_b2 = None
        else:
            self.task_w1, self.task_b1 = _init_linear(keys[4], task_in_dim, 32)
            self.task_w2, self.task_b2 = _init_linear(keys[5], 32,
                                                      task_out_dim)

        # Kernel weights: bf16, lane-padded on output dims (padded rows/cols
        # are zero so valid outputs are unaffected).  fm_w1 keeps its natural
        # D rows so x can be streamed unpadded in the feature dim.
        self._fm = (
            _pad_w(self.fm_w1, input_dim, Hp), _pad_b(self.fm_b1, Hp),
            _pad_w(self.fm_w2, Hp, Hp),        _pad_b(self.fm_b2, Hp),
            _pad_w(self.fm_w3, Hp, self.Dp),   _pad_b(self.fm_b3, self.Dp),
        )
        self._sbj = (_pad_w(self.sbj_w, self.Dp, self.Sp),
                     _pad_b(self.sbj_b, self.Sp))
        # Task head consuming the full (Dp-wide) feature (feature_idx is None).
        self._task = None
        if task_in_dim <= self.Dp:
            if classifier == 'LR':
                self._task = (_pad_w(self.task_w1, self.Dp, self.Top),
                              _pad_b(self.task_b1, self.Top))
            else:
                self._task = (_pad_w(self.task_w1, self.Dp, self.T32p),
                              _pad_b(self.task_b1, self.T32p),
                              _pad_w(self.task_w2, self.T32p, self.Top),
                              _pad_b(self.task_b2, self.Top))
        self._task_folded = None
        self._folded_key = None

    def _task_weights(self):
        if self.feature_idx is None:
            assert self._task is not None, \
                "task_in_dim must be <= input_dim when feature_idx is None"
            return self._task
        key = tuple(int(i) for i in self.feature_idx)
        if self._folded_key != key:
            # Fold the (data-independent) column gather feature[:, feature_idx]
            # into the first task-head weight via a scatter-add of its rows, so
            # id='2' runs the same single fused kernel with no HBM round trip.
            idx = jnp.asarray(key, dtype=jnp.int32)
            w1_fold = jnp.zeros((self.input_dim, self.task_w1.shape[1]),
                                jnp.float32).at[idx].add(self.task_w1)
            if self.classifier == 'LR':
                self._task_folded = (_pad_w(w1_fold, self.Dp, self.Top),
                                     _pad_b(self.task_b1, self.Top))
            else:
                self._task_folded = (_pad_w(w1_fold, self.Dp, self.T32p),
                                     _pad_b(self.task_b1, self.T32p),
                                     _pad_w(self.task_w2, self.T32p, self.Top),
                                     _pad_b(self.task_b2, self.Top))
            self._folded_key = key
        return self._task_folded

    def __call__(self, x, id):
        D, S, T = self.input_dim, self.sbj_dim, self.task_out_dim
        if id == '0':
            (f,) = _run(_feature_kernel, x, (self.Dp,), (D,), *self._fm)
            return f
        elif id == '1':
            (s,) = _run(_sbj_kernel, x, (self.Sp,), (S,),
                        *(self._fm + self._sbj))
            return s
        elif id == '0,1':
            f, s = _run(_feature_sbj_kernel, x, (self.Dp, self.Sp), (D, S),
                        *(self._fm + self._sbj))
            return [f, s]
        elif id == '2':
            tw = self._task_weights()
            kern = (_task_lr_kernel if self.classifier == 'LR'
                    else _task_mlp_kernel)
            (o,) = _run(kern, x, (self.Top,), (T,), *(self._fm + tw))
            return o


# ---------------------------------------------------------------------------
# Pure-JAX f32 reference for correctness check
# ---------------------------------------------------------------------------

def _ref_feature(x, m):
    h = jnp.maximum(x @ m.fm_w1 + m.fm_b1, 0.0)
    h = jnp.maximum(h @ m.fm_w2 + m.fm_b2, 0.0)
    return h @ m.fm_w3 + m.fm_b3


if __name__ == "__main__":
    key = jax.random.PRNGKey(0)
    k_mlp, k_lr, k_idx, k_x = jax.random.split(key, 4)

    batch = 8
    input_dim = 32
    sbj_dim = 8
    task_out_dim = 4

    model = MLPWhitingPallas(input_dim, sbj_dim, input_dim, task_out_dim,
                             classifier='MLP', key=k_mlp)
    model_lr = MLPWhitingPallas(input_dim, sbj_dim, input_dim, task_out_dim,
                                classifier='LR', key=k_lr)
    # feature_idx path: task head consumes a gathered column subset (folded
    # into the task weights -> same single fused kernel).
    feature_idx = [5, 1, 9, 3, 20, 7, 11, 30]
    model_idx = MLPWhitingPallas(input_dim, sbj_dim, len(feature_idx),
                                 task_out_dim, classifier='MLP', key=k_idx)
    model_idx.feature_idx = feature_idx

    x = jax.random.normal(k_x, (batch, input_dim), dtype=jnp.float32)

    feat = model(x, '0');          jax.block_until_ready(feat)
    sbj = model(x, '1');           jax.block_until_ready(sbj)
    both = model(x, '0,1');        jax.block_until_ready(both)
    task = model(x, '2');          jax.block_until_ready(task)
    task_lr = model_lr(x, '2');    jax.block_until_ready(task_lr)
    task_idx = model_idx(x, '2');  jax.block_until_ready(task_idx)

    # Sanity vs pure-JAX f32 reference (kernels use bf16 matmul operands and
    # bf16 output stores -> loosened tolerance).
    ref_feat = _ref_feature(x, model)
    ref_sbj = ref_feat @ model.sbj_w + model.sbj_b
    ref_task = (jnp.maximum(ref_feat @ model.task_w1 + model.task_b1, 0.0)
                @ model.task_w2 + model.task_b2)
    ref_task_lr = _ref_feature(x, model_lr) @ model_lr.task_w1 + model_lr.task_b1
    fi = _ref_feature(x, model_idx)[:, jnp.asarray(feature_idx)]
    ref_task_idx = (jnp.maximum(fi @ model_idx.task_w1 + model_idx.task_b1, 0.0)
                    @ model_idx.task_w2 + model_idx.task_b2)

    TOL = dict(atol=5e-2, rtol=5e-2)
    assert feat.shape == (batch, input_dim)
    assert sbj.shape == (batch, sbj_dim)
    assert task.shape == (batch, task_out_dim)
    assert task_lr.shape == (batch, task_out_dim)
    assert task_idx.shape == (batch, task_out_dim)
    assert jnp.allclose(feat, ref_feat, **TOL)
    assert jnp.allclose(sbj, ref_sbj, **TOL)
    assert jnp.allclose(both[0], ref_feat, **TOL)
    assert jnp.allclose(both[1], ref_sbj, **TOL)
    assert jnp.allclose(task, ref_task, **TOL)
    assert jnp.allclose(task_lr, ref_task_lr, **TOL)
    assert jnp.allclose(task_idx, ref_task_idx, **TOL)

    print("KERNEL_OK")
</pallas_src>

<mosaic_0001>
module attributes {stable_mosaic.version = 11 : i64} {
  func.func @_feature_kernel(%arg0: i32, %arg1: memref<16x32xf32, #tpu.memory_space<vmem>>, %arg2: memref<32x128xbf16, #tpu.memory_space<vmem>>, %arg3: memref<1x128xf32, #tpu.memory_space<vmem>>, %arg4: memref<128x128xbf16, #tpu.memory_space<vmem>>, %arg5: memref<1x128xf32, #tpu.memory_space<vmem>>, %arg6: memref<128x128xbf16, #tpu.memory_space<vmem>>, %arg7: memref<1x128xf32, #tpu.memory_space<vmem>>, %arg8: memref<16x128xbf16, #tpu.memory_space<vmem>>) attributes {dimension_semantics = [#tpu.dimension_semantics<parallel>], iteration_bounds = array<i64: 1>, scalar_prefetch = 0 : i64, scratch_operands = 0 : i64, tpu.core_type = #tpu.core_type<tc>, window_params = [{transform_indices = @transform_0, window_bounds = array<i64: 16, 32>}, {pipeline_mode = #tpu.pipeline_mode<synchronous>, transform_indices = @transform_1, window_bounds = array<i64: 32, 128>}, {pipeline_mode = #tpu.pipeline_mode<synchronous>, transform_indices = @transform_2, window_bounds = array<i64: 1, 128>}, {pipeline_mode = #tpu.pipeline_mode<synchronous>, transform_indices = @transform_3, window_bounds = array<i64: 128, 128>}, {pipeline_mode = #tpu.pipeline_mode<synchronous>, transform_indices = @transform_4, window_bounds = array<i64: 1, 128>}, {pipeline_mode = #tpu.pipeline_mode<synchronous>, transform_indices = @transform_5, window_bounds = array<i64: 128, 128>}, {pipeline_mode = #tpu.pipeline_mode<synchronous>, transform_indices = @transform_6, window_bounds = array<i64: 1, 128>}, {transform_indices = @transform_7, window_bounds = array<i64: 16, 128>}]} {
    %c0 = arith.constant 0 : index
    %c0_0 = arith.constant 0 : index
    %0 = vector.load %arg1[%c0, %c0_0] : memref<16x32xf32, #tpu.memory_space<vmem>>, vector<16x32xf32>
    %1 = arith.truncf %0 : vector<16x32xf32> to vector<16x32xbf16>
    %c0_1 = arith.constant 0 : index
    %c0_2 = arith.constant 0 : index
    %2 = vector.load %arg2[%c0_1, %c0_2] : memref<32x128xbf16, #tpu.memory_space<vmem>>, vector<32x128xbf16>
    %cst = arith.constant dense<0.000000e+00> : vector<16x128xf32>
    %3 = tpu.matmul %1, %2, %cst {dimension_numbers = #tpu.dot_dimension_numbers<[1], [0], [0], [1], [0, 0, 1, 1], [], []>} : vector<16x32xbf16>, vector<32x128xbf16>, vector<16x128xf32> -> vector<16x128xf32>
    %c0_3 = arith.constant 0 : index
    %c0_4 = arith.constant 0 : index
    %4 = vector.load %arg3[%c0_3, %c0_4] : memref<1x128xf32, #tpu.memory_space<vmem>>, vector<1x128xf32>
    %5 = vector.broadcast %4 : vector<1x128xf32> to vector<16x128xf32>
    %6 = arith.addf %3, %5 : vector<16x128xf32>
    %cst_5 = arith.constant 0.000000e+00 : f32
    %7 = vector.broadcast %cst_5 : f32 to vector<16x128xf32>
    %8 = arith.maximumf %6, %7 : vector<16x128xf32>
    %9 = arith.truncf %8 : vector<16x128xf32> to vector<16x128xbf16>
    %c0_6 = arith.constant 0 : index
    %c0_7 = arith.constant 0 : index
    %10 = vector.load %arg4[%c0_6, %c0_7] : memref<128x128xbf16, #tpu.memory_space<vmem>>, vector<128x128xbf16>
    %cst_8 = arith.constant dense<0.000000e+00> : vector<16x128xf32>
    %11 = tpu.matmul %9, %10, %cst_8 {dimension_numbers = #tpu.dot_dimension_numbers<[1], [0], [0], [1], [0, 0, 1, 1], [], []>} : vector<16x128xbf16>, vector<128x128xbf16>, vector<16x128xf32> -> vector<16x128xf32>
    %c0_9 = arith.constant 0 : index
    %c0_10 = arith.constant 0 : index
    %12 = vector.load %arg5[%c0_9, %c0_10] : memref<1x128xf32, #tpu.memory_space<vmem>>, vector<1x128xf32>
    %13 = vector.broadcast %12 : vector<1x128xf32> to vector<16x128xf32>
    %14 = arith.addf %11, %13 : vector<16x128xf32>
    %cst_11 = arith.constant 0.000000e+00 : f32
    %15 = vector.broadcast %cst_11 : f32 to vector<16x128xf32>
    %16 = arith.maximumf %14, %15 : vector<16x128xf32>
    %17 = arith.truncf %16 : vector<16x128xf32> to vector<16x128xbf16>
    %c0_12 = arith.constant 0 : index
    %c0_13 = arith.constant 0 : index
    %18 = vector.load %arg6[%c0_12, %c0_13] : memref<128x128xbf16, #tpu.memory_space<vmem>>, vector<128x128xbf16>
    %cst_14 = arith.constant dense<0.000000e+00> : vector<16x128xf32>
    %19 = tpu.matmul %17, %18, %cst_14 {dimension_numbers = #tpu.dot_dimension_numbers<[1], [0], [0], [1], [0, 0, 1, 1], [], []>} : vector<16x128xbf16>, vector<128x128xbf16>, vector<16x128xf32> -> vector<16x128xf32>
    %c0_15 = arith.constant 0 : index
    %c0_16 = arith.constant 0 : index
    %20 = vector.load %arg7[%c0_15, %c0_16] : memref<1x128xf32, #tpu.memory_space<vmem>>, vector<1x128xf32>
    %21 = vector.broadcast %20 : vector<1x128xf32> to vector<16x128xf32>
    %22 = arith.addf %19, %21 : vector<16x128xf32>
    %23 = arith.truncf %22 : vector<16x128xf32> to vector<16x128xbf16>
    %c0_17 = arith.constant 0 : index
    %c0_18 = arith.constant 0 : index
    %24 = vector.load %arg8[%c0_17, %c0_18] : memref<16x128xbf16, #tpu.memory_space<vmem>>, vector<16x128xbf16>
    tpu.vector_store %arg8[%c0_17, %c0_18], %23 {strides = array<i32>} : memref<16x128xbf16, #tpu.memory_space<vmem>>, vector<16x128xbf16>,
    return
  }
  func.func @transform_0(%arg0: i32) -> (i32, i32) {
    %c0_i32 = arith.constant 0 : i32
    %c0_i32_0 = arith.constant 0 : i32
    return %arg0, %c0_i32 : i32, i32
  }
  func.func @transform_1(%arg0: i32) -> (i32, i32) {
    %c0_i32 = arith.constant 0 : i32
    %c0_i32_0 = arith.constant 0 : i32
    %c0_i32_1 = arith.constant 0 : i32
    return %c0_i32, %c0_i32_0 : i32, i32
  }
  func.func @transform_2(%arg0: i32) -> (i32, i32) {
    %c0_i32 = arith.constant 0 : i32
    %c0_i32_0 = arith.constant 0 : i32
    %c0_i32_1 = arith.constant 0 : i32
    return %c0_i32, %c0_i32_0 : i32, i32
  }
  func.func @transform_3(%arg0: i32) -> (i32, i32) {
    %c0_i32 = arith.constant 0 : i32
    %c0_i32_0 = arith.constant 0 : i32
    %c0_i32_1 = arith.constant 0 : i32
    return %c0_i32, %c0_i32_0 : i32, i32
  }
  func.func @transform_4(%arg0: i32) -> (i32, i32) {
    %c0_i32 = arith.constant 0 : i32
    %c0_i32_0 = arith.constant 0 : i32
    %c0_i32_1 = arith.constant 0 : i32
    return %c0_i32, %c0_i32_0 : i32, i32
  }
  func.func @transform_5(%arg0: i32) -> (i32, i32) {
    %c0_i32 = arith.constant 0 : i32
    %c0_i32_0 = arith.constant 0 : i32
    %c0_i32_1 = arith.constant 0 : i32
    return %c0_i32, %c0_i32_0 : i32, i32
  }
  func.func @transform_6(%arg0: i32) -> (i32, i32) {
    %c0_i32 = arith.constant 0 : i32
    %c0_i32_0 = arith.constant 0 : i32
    %c0_i32_1 = arith.constant 0 : i32
    return %c0_i32, %c0_i32_0 : i32, i32
  }
  func.func @transform_7(%arg0: i32) -> (i32, i32) {
    %c0_i32 = arith.constant 0 : i32
    %c0_i32_0 = arith.constant 0 : i32
    return %arg0, %c0_i32 : i32, i32
  }
}

</mosaic_0001>

<llo_original>
// kernel: _run.1
$region0: #{_run.1}
  #allocation0 [shape = 'u32[]', space=smem, size = 0x4, offset = 0x4, fixed_abs, tag = 'smem constant byte address 0x4 - core index']
  #allocation1 [shape = 'u32[72,128]{1,0:T(1,128)}', space=vmem, size = 0x9000, scoped, tag = 'internal scratch']
  %s0 = inlined_call_operand.vmem [shape: f32[16,32], index: 0, kind: input, shape index: {}]
  %s1 = inlined_call_operand.vmem [shape: bf16[32,128], index: 1, kind: input, shape index: {}]
  %s2 = inlined_call_operand.vmem [shape: f32[1,128], index: 2, kind: input, shape index: {}]
  %s3 = inlined_call_operand.hbm [shape: bf16[128,128], index: 3, kind: input, shape index: {}]
  %s4 = inlined_call_operand.vmem [shape: f32[1,128], index: 4, kind: input, shape index: {}]
  %s5 = inlined_call_operand.hbm [shape: bf16[128,128], index: 5, kind: input, shape index: {}]
  %s6 = inlined_call_operand.vmem [shape: f32[1,128], index: 6, kind: input, shape index: {}]
  %s7 = inlined_call_operand.vmem [shape: bf16[16,128], index: 7, kind: output, shape index: {}]
  %s8 = sld [smem:[#allocation0]]
  $region46: #{_run.1} parent=0
    _
  %s10 = ssub.s32 1, %s8
  %s11 = scalar_select 0, %s10, %s8
  $region1: #{_run.1} parent=0
    #allocation2 [shape = 'u8[32768]{0}', space=vmem, size = 0x8000, scoped, tag = 'input window, operand 3, single buffered']
    #allocation3 [shape = 's32[1]{0}', space=sflag, size = 0x4, scoped, tag = 'scoped memory for _run.1']
    #allocation4 [shape = 'u8[32768]{0}', space=vmem, size = 0x8000, scoped, tag = 'input window, operand 5, single buffered']
    #allocation5 [shape = 's32[1]{0}', space=sflag, size = 0x4, scoped, tag = 'scoped memory for _run.1']
    %12 = vsyncpa [#allocation3], 0
    %13 = vsyncpa [#allocation5], 0
    // Predicated region
    $region2: #{_run.1} parent=1 // pred_check
      _
    $region3: #{_run.1} parent=1 // pred_check_branch
      %15 = sbr.rel (0) target = $region5
    $region4: #{_run.1} parent=1 // pred_region
      _
    $region5: #{_run.1} parent=1 // pred_fallthru
      _
    // Predicated region
    $region6: #{_run.1} parent=1 // pred_check
      _
    $region7: #{_run.1} parent=1 // pred_check_branch
      %17 = sbr.rel (0) target = $region9
    $region8: #{_run.1} parent=1 // pred_region
      _
    $region9: #{_run.1} parent=1 // pred_fallthru
      _
    // Predicated region
    $region10: #{_run.1} parent=1 // pred_check
      _
    $region11: #{_run.1} parent=1 // pred_check_branch
      %19 = sbr.rel (0) target = $region13
    $region12: #{_run.1} parent=1 // pred_region
      _
    $region13: #{_run.1} parent=1 // pred_fallthru
      _
    // Predicated region
    $region14: #{_run.1} parent=1 // pred_check
      _
    $region15: #{_run.1} parent=1 // pred_check_branch
      %21 = sbr.rel (0) target = $region17
    $region16: #{_run.1} parent=1 // pred_region
      %23 = vsyncadd [#allocation3], 0
      %s24 = sshll.u32 %s3, 4
      %s25 = int_to_ptr.hbm [resolvable:$true] %s24
      %s26 = sshll.u32 [#allocation2], 4
      %s27 = int_to_ptr.vmem [resolvable:$true] %s26
      %32 = dma.hbm_to_vmem [thread:$0]  %s25, 1024, %s27, [#allocation3], 64, 64, 4
    $region17: #{_run.1} parent=1 // pred_fallthru
      _
    // Predicated region
    $region18: #{_run.1} parent=1 // pred_check
      _
    $region19: #{_run.1} parent=1 // pred_check_branch
      %34 = sbr.rel (0) target = $region21
    $region20: #{_run.1} parent=1 // pred_region
      _
    $region21: #{_run.1} parent=1 // pred_fallthru
      _
    // Predicated region
    $region22: #{_run.1} parent=1 // pred_check
      _
    $region23: #{_run.1} parent=1 // pred_check_branch
      %36 = sbr.rel (0) target = $region25
    $region24: #{_run.1} parent=1 // pred_region
      %38 = vsyncadd [#allocation5], 0
      %s39 = sshll.u32 %s5, 4
      %s40 = int_to_ptr.hbm [resolvable:$true] %s39
      %s41 = sshll.u32 [#allocation4], 4
      %s42 = int_to_ptr.vmem [resolvable:$true] %s41
      %47 = dma.hbm_to_vmem [thread:$0]  %s40, 1024, %s42, [#allocation5], 64, 64, 4
    $region25: #{_run.1} parent=1 // pred_fallthru
      _
    // Predicated region
    $region26: #{_run.1} parent=1 // pred_check
      _
    $region27: #{_run.1} parent=1 // pred_check_branch
      %49 = sbr.rel (0) target = $region29
    $region28: #{_run.1} parent=1 // pred_region
      _
    $region29: #{_run.1} parent=1 // pred_fallthru
      _
    // Predicated region
    $region30: #{_run.1} parent=1 // pred_check
      _
    $region31: #{_run.1} parent=1 // pred_check_branch
      %51 = sbr.rel (0) target = $region33
    $region32: #{_run.1} parent=1 // pred_region
      %53 = dma.done [#allocation3], 1024
    $region33: #{_run.1} parent=1 // pred_fallthru
      _
    // Predicated region
    $region34: #{_run.1} parent=1 // pred_check
      _
    $region35: #{_run.1} parent=1 // pred_check_branch
      %55 = sbr.rel (0) target = $region37
    $region36: #{_run.1} parent=1 // pred_region
      %57 = dma.done [#allocation5], 1024
    $region37: #{_run.1} parent=1 // pred_fallthru
      _
    %v59 = vld [vmem:[%s0] sm:$0xff]
    %v60 = vld [vmem:[%s0 + $0x8] sm:$0xff]
    %v61 = vpack.c.bf16 %v60, %v59
    %v62 = vld [vmem:[%s1] sm:$0xf]
    %v63 = vld [vmem:[%s1 + $0x4] sm:$0xf]
    %v64 = vld [vmem:[%s1 + $0x8] sm:$0xf]
    %v65 = vld [vmem:[%s1 + $0xc] sm:$0xf]
    %v66 = vld [vmem:[%s2] sm:$0x1]
    %v68 = vperm.slane %v66, 0
    %v74 = vunpack.c.l.b16 %v62
    %v75 = vunpack.c.l.b16 %v63
    %v76 = vunpack.c.l.b16 %v64
    %v77 = vunpack.c.l.b16 %v65
    %v78 = vpack.c.b16 %v75, %v74
    %v79 = vpack.c.b16 %v77, %v76
    %vm82 = vcmask 261120
    %v84 = vsel %vm82, %v61, 0
    %86 = vmatpush.bf16.msra.mxu0 0
    %87 = vmatpush.bf16.msra.mxu0 0
    %88 = vmatpush.bf16.msra.mxu0 0
    %89 = vmatpush.bf16.msra.mxu0 0
    %90 = vmatpush.bf16.msra.mxu0 0
    %91 = vmatpush.bf16.msra.mxu0 0
    %92 = vmatpush.bf16.msra.mxu0 %v79
    %93 = vmatpush.bf16.msra.mxu0 %v78
    %94 = vmatmul.bf16.gmra.mxu0 %v84
    %v95 = vpop.f32.mrf.mxu0
    %v96 = vadd.f32 %v68, %v95
    %v97 = vpop.f32.mrf.mxu0
    %v98 = vadd.f32 %v68, %v97
    %99 = vdwg.mxu0
    %v100 = vmax.f32 %v96, 0.0
    %v101 = vmax.f32 %v98, 0.0
    %v102 = vpack.c.bf16 %v101, %v100
    %v103 = vld [vmem:[#allocation2] sm:$0xf]
    %v104 = vld [vmem:[#allocation2 + $0x4] sm:$0xf]
    %v105 = vld [vmem:[#allocation2 + $0x8] sm:$0xf]
    %v106 = vld [vmem:[#allocation2 + $0xc] sm:$0xf]
    %v107 = vld [vmem:[#allocation2 + $0x10] sm:$0xf]
    %v108 = vld [vmem:[#allocation2 + $0x14] sm:$0xf]
    %v109 = vld [vmem:[#allocation2 + $0x18] sm:$0xf]
    %v110 = vld [vmem:[#allocation2 + $0x1c] sm:$0xf]
    %v111 = vld [vmem:[#allocation2 + $0x20] sm:$0xf]
    %v112 = vld [vmem:[#allocation2 + $0x24] sm:$0xf]
    %v113 = vld [vmem:[#allocation2 + $0x28] sm:$0xf]
    %v114 = vld [vmem:[#allocation2 + $0x2c] sm:$0xf]
    %v115 = vld [vmem:[#allocation2 + $0x30] sm:$0xf]
    %v116 = vld [vmem:[#allocation2 + $0x34] sm:$0xf]
    %v117 = vld [vmem:[#allocation2 + $0x38] sm:$0xf]
    %v118 = vld [vmem:[#allocation2 + $0x3c] sm:$0xf]
    %v119 = vld [vmem:[%s4] sm:$0x1]
    %v121 = vperm.slane %v119, 0
    %v139 = vunpack.c.l.b16 %v103
    %v140 = vunpack.c.l.b16 %v104
    %v141 = vunpack.c.l.b16 %v105
    %v142 = vunpack.c.l.b16 %v106
    %v143 = vunpack.c.l.b16 %v107
    %v144 = vunpack.c.l.b16 %v108
    %v145 = vunpack.c.l.b16 %v109
    %v146 = vunpack.c.l.b16 %v110
    %v147 = vunpack.c.l.b16 %v111
    %v148 = vunpack.c.l.b16 %v112
    %v149 = vunpack.c.l.b16 %v113
    %v150 = vunpack.c.l.b16 %v114
    %v151 = vunpack.c.l.b16 %v115
    %v152 = vunpack.c.l.b16 %v116
    %v153 = vunpack.c.l.b16 %v117
    %v154 = vunpack.c.l.b16 %v118
    %v155 = vpack.c.b16 %v140, %v139
    %v156 = vpack.c.b16 %v142, %v141
    %v157 = vpack.c.b16 %v144, %v143
    %v158 = vpack.c.b16 %v146, %v145
    %v159 = vpack.c.b16 %v148, %v147
    %v160 = vpack.c.b16 %v150, %v149
    %v161 = vpack.c.b16 %v152, %v151
    %v162 = vpack.c.b16 %v154, %v153
    %171 = vmatpush.bf16.msra.mxu0 %v162
    %172 = vmatpush.bf16.msra.mxu0 %v161
    %173 = vmatpush.bf16.msra.mxu0 %v160
    %174 = vmatpush.bf16.msra.mxu0 %v159
    %175 = vmatpush.bf16.msra.mxu0 %v158
    %176 = vmatpush.bf16.msra.mxu0 %v157
    %177 = vmatpush.bf16.msra.mxu0 %v156
    %178 = vmatpush.bf16.msra.mxu0 %v155
    %179 = vmatmul.bf16.gmra.mxu0 %v102
    %v180 = vpop.f32.mrf.mxu0
    %v181 = vadd.f32 %v121, %v180
    %v182 = vpop.f32.mrf.mxu0
    %v183 = vadd.f32 %v121, %v182
    %184 = vdwg.mxu0
    %v185 = vmax.f32 %v181, 0.0
    %v186 = vmax.f32 %v183, 0.0
    %v187 = vpack.c.bf16 %v186, %v185
    %v188 = vld [vmem:[#allocation4] sm:$0xf]
    %v189 = vld [vmem:[#allocation4 + $0x4] sm:$0xf]
    %v190 = vld [vmem:[#allocation4 + $0x8] sm:$0xf]
    %v191 = vld [vmem:[#allocation4 + $0xc] sm:$0xf]
    %v192 = vld [vmem:[#allocation4 + $0x10] sm:$0xf]
    %v193 = vld [vmem:[#allocation4 + $0x14] sm:$0xf]
    %v194 = vld [vmem:[#allocation4 + $0x18] sm:$0xf]
    %v195 = vld [vmem:[#allocation4 + $0x1c] sm:$0xf]
    %v196 = vld [vmem:[#allocation4 + $0x20] sm:$0xf]
    %v197 = vld [vmem:[#allocation4 + $0x24] sm:$0xf]
    %v198 = vld [vmem:[#allocation4 + $0x28] sm:$0xf]
    %v199 = vld [vmem:[#allocation4 + $0x2c] sm:$0xf]
    %v200 = vld [vmem:[#allocation4 + $0x30] sm:$0xf]
    %v201 = vld [vmem:[#allocation4 + $0x34] sm:$0xf]
    %v202 = vld [vmem:[#allocation4 + $0x38] sm:$0xf]
    %v203 = vld [vmem:[#allocation4 + $0x3c] sm:$0xf]
    %v204 = vld [vmem:[%s6] sm:$0x1]
    %v206 = vperm.slane %v204, 0
    %v224 = vunpack.c.l.b16 %v188
    %v225 = vunpack.c.l.b16 %v189
    %v226 = vunpack.c.l.b16 %v190
    %v227 = vunpack.c.l.b16 %v191
    %v228 = vunpack.c.l.b16 %v192
    %v229 = vunpack.c.l.b16 %v193
    %v230 = vunpack.c.l.b16 %v194
    %v231 = vunpack.c.l.b16 %v195
    %v232 = vunpack.c.l.b16 %v196
    %v233 = vunpack.c.l.b16 %v197
    %v234 = vunpack.c.l.b16 %v198
    %v235 = vunpack.c.l.b16 %v199
    %v236 = vunpack.c.l.b16 %v200
    %v237 = vunpack.c.l.b16 %v201
    %v238 = vunpack.c.l.b16 %v202
    %v239 = vunpack.c.l.b16 %v203
    %v240 = vpack.c.b16 %v225, %v224
    %v241 = vpack.c.b16 %v227, %v226
    %v242 = vpack.c.b16 %v229, %v228
    %v243 = vpack.c.b16 %v231, %v230
    %v244 = vpack.c.b16 %v233, %v232
    %v245 = vpack.c.b16 %v235, %v234
    %v246 = vpack.c.b16 %v237, %v236
    %v247 = vpack.c.b16 %v239, %v238
    %256 = vmatpush.bf16.msra.mxu0 %v247
    %257 = vmatpush.bf16.msra.mxu0 %v246
    %258 = vmatpush.bf16.msra.mxu0 %v245
    %259 = vmatpush.bf16.msra.mxu0 %v244
    %260 = vmatpush.bf16.msra.mxu0 %v243
    %261 = vmatpush.bf16.msra.mxu0 %v242
    %262 = vmatpush.bf16.msra.mxu0 %v241
    %263 = vmatpush.bf16.msra.mxu0 %v240
    %264 = vmatmul.bf16.gmra.mxu0 %v187
    %v265 = vpop.f32.mrf.mxu0
    %v266 = vadd.f32 %v206, %v265
    %v267 = vpop.f32.mrf.mxu0
    %v268 = vadd.f32 %v206, %v267
    %269 = vdwg.mxu0
    %v270 = vpack.c.bf16 %v266, %v266
    %v271 = vpack.c.bf16 %v268, %v268
    %272 = vst [vmem:[%s7] sm:$0xf] %v270
    %273 = vst [vmem:[%s7 + $0x4] sm:$0xf] %v271
    // Predicated region
    $region38: #{_run.1} parent=1 // pred_check
      _
    $region39: #{_run.1} parent=1 // pred_check_branch
      %275 = sbr.rel (0) target = $region41
    $region40: #{_run.1} parent=1 // pred_region
      _
    $region41: #{_run.1} parent=1 // pred_fallthru
      _
    // Predicated region
    $region42: #{_run.1} parent=1 // pred_check
      _
    $region43: #{_run.1} parent=1 // pred_check_branch
      %277 = sbr.rel (0) target = $region45
    $region44: #{_run.1} parent=1 // pred_region
      _
    $region45: #{_run.1} parent=1 // pred_fallthru
      _
    %278 = vsyncpa [#allocation3], 1
    %279 = vsyncpa [#allocation5], 1

</llo_original>
